<compile_context>
chip_gen: v6e
topology: v6e:2x2x1
jax: 0.10.0
libtpu: 0.0.40
codegen_flags: <defaults>
</compile_context>

<pallas_src>
import math
import jax
import jax.numpy as jnp
from jax.experimental import pallas as pl
from jax.experimental.pallas import tpu as pltpu


def _round_up(n, m):
    return ((n + m - 1) // m) * m


_INV_SQRT2 = 1.0 / math.sqrt(2.0)


def _mlp_head_kernel(x_ref, w1_ref, b1_ref, w2_ref, b2_ref, o_ref):
    # Hidden layer: x @ W1 + b1 (MXU, true-f32 passes, f32 accumulation).
    x = x_ref[...]
    h = jnp.dot(x, w1_ref[...],
                preferred_element_type=jnp.float32,
                precision=jax.lax.Precision.HIGHEST) + b1_ref[...]

    # Dropout(drop_rate) -> identity at inference. Exact (erf) GELU, matching torch.nn.GELU().
    h = 0.5 * h * (1.0 + jax.lax.erf(h * jnp.float32(_INV_SQRT2)))

    # Output layer: h @ W2 + b2. W2 keeps its narrow (num_classes) output width so the store /
    # HBM writeback is only B*num_classes, not B*128.
    out = jnp.dot(h, w2_ref[...],
                  preferred_element_type=jnp.float32,
                  precision=jax.lax.Precision.HIGHEST) + b2_ref[...]
    o_ref[...] = out.astype(o_ref.dtype)


def prepare_params(params):
    """One-time preprocessing (NOT per call): cast to f32 and zero-pad the hidden dim to a
    multiple of 128 lanes. Inert: padded W1 cols / b1 entries are zero so GELU(0)=0, and the
    matching padded W2 rows are zero."""
    f32 = jnp.float32
    w1 = params["w1"].astype(f32)
    b1 = params["b1"].reshape(1, -1).astype(f32)
    w2 = params["w2"].astype(f32)
    b2 = params["b2"].reshape(1, -1).astype(f32)
    base_dim, mid_dim = w1.shape
    num_classes = w2.shape[1]
    Mp = _round_up(mid_dim, 128)
    w1p = jnp.zeros((base_dim, Mp), f32).at[:, :mid_dim].set(w1)
    b1p = jnp.zeros((1, Mp), f32).at[:, :mid_dim].set(b1)
    w2p = jnp.zeros((Mp, num_classes), f32).at[:mid_dim, :].set(w2)
    return {"w1": w1p, "b1": b1p, "w2": w2p, "b2": b2}


def classifier_head_2(x, mask, prepared, *, batch_tile=1024):
    """x: [B, base_dim] float32. mask is ignored (as in the PyTorch module).
    `prepared` comes from prepare_params() (padded/cast once, outside the call)."""
    del mask  # unused by ClassifierHead_2.forward
    B, base_dim = x.shape
    Mp = prepared["w1"].shape[1]
    num_classes = prepared["w2"].shape[1]

    # Batch tile: multiple of 8 (sublane); split so >=2 tiles exist whenever B allows it so the
    # "parallel" grid axis feeds both v7x TensorCores. No padding of B to a multiple of TB —
    # pl.cdiv gives a masked remainder tile, so waste is bounded by 7 rows.
    TB = min(int(batch_tile), max(8, _round_up(-(-B // 2), 8)))
    TB = _round_up(TB, 8)
    grid = (pl.cdiv(B, TB),)

    # VMEM budget (bytes). Tiles are lane/sublane padded by Mosaic internally; assume the
    # constant-index weight blocks may still be double-buffered by the pipeline.
    lanes_x = _round_up(base_dim, 128)
    lanes_o = _round_up(num_classes, 128)
    weight_vmem = 4 * (_round_up(base_dim, 8) * Mp + 8 * Mp          # w1, b1
                       + Mp * lanes_o + 8 * lanes_o)                 # w2, b2
    tile_vmem = 4 * TB * (2 * lanes_x + 2 * lanes_o + 2 * Mp)        # x/out double-buffered + h
    vmem_bytes = 2 * weight_vmem + tile_vmem

    try:
        vmem_cap = int(pltpu.get_tpu_info().vmem_capacity_bytes)
    except Exception:
        vmem_cap = 64 * 1024 * 1024          # conservative fallback (v7x per-core VMEM)
    vmem_ceiling = (3 * vmem_cap) // 4       # leave headroom for Mosaic internal scratch
    vmem_limit = int(min(vmem_ceiling, max(32 * 1024 * 1024, int(vmem_bytes * 1.5))))

    # Real (unpadded-x, narrow-output, weights-once) traffic and flops.
    cost = pl.CostEstimate(
        flops=2 * B * (base_dim * Mp + Mp * num_classes),
        transcendentals=B * Mp,
        bytes_accessed=4 * (B * base_dim
                            + base_dim * Mp + Mp
                            + Mp * num_classes + num_classes
                            + B * num_classes),
    )

    out = pl.pallas_call(
        _mlp_head_kernel,
        out_shape=jax.ShapeDtypeStruct((B, num_classes), jnp.float32),
        grid=grid,
        in_specs=[
            pl.BlockSpec((TB, base_dim), lambda i: (i, 0)),      # x: batch-tiled, unpadded
            pl.BlockSpec((base_dim, Mp), lambda i: (0, 0)),      # w1: resident across grid
            pl.BlockSpec((1, Mp), lambda i: (0, 0)),             # b1: resident
            pl.BlockSpec((Mp, num_classes), lambda i: (0, 0)),   # w2: resident (narrow N)
            pl.BlockSpec((1, num_classes), lambda i: (0, 0)),    # b2: resident
        ],
        out_specs=pl.BlockSpec((TB, num_classes), lambda i: (i, 0)),
        compiler_params=pltpu.CompilerParams(
            dimension_semantics=("parallel",),   # batch tiles shard across TCs (v7x megacore)
            vmem_limit_bytes=vmem_limit,
        ),
        cost_estimate=cost,
    )(x.astype(jnp.float32), prepared["w1"], prepared["b1"], prepared["w2"], prepared["b2"])
    return out


def init_params(key, base_dim, mid_dim, num_classes=5, dtype=jnp.float32):
    """Deterministic init mimicking torch.nn.Linear default (U(-1/sqrt(fan_in), 1/sqrt(fan_in)))."""
    k1, k2, k3, k4 = jax.random.split(key, 4)
    lim1 = 1.0 / math.sqrt(base_dim)
    lim2 = 1.0 / math.sqrt(mid_dim)
    return {
        "w1": jax.random.uniform(k1, (base_dim, mid_dim), dtype, -lim1, lim1),
        "b1": jax.random.uniform(k2, (1, mid_dim), dtype, -lim1, lim1),
        "w2": jax.random.uniform(k3, (mid_dim, num_classes), dtype, -lim2, lim2),
        "b2": jax.random.uniform(k4, (1, num_classes), dtype, -lim2, lim2),
    }


def _reference(x, params):
    h = jnp.dot(x, params["w1"], precision=jax.lax.Precision.HIGHEST) + params["b1"].reshape(1, -1)
    h = 0.5 * h * (1.0 + jax.lax.erf(h * jnp.float32(_INV_SQRT2)))
    return (jnp.dot(h, params["w2"], precision=jax.lax.Precision.HIGHEST)
            + params["b2"].reshape(1, -1))


if __name__ == "__main__":
    key = jax.random.PRNGKey(0)
    kx, kp = jax.random.split(key)

    B, base_dim, mid_dim, num_classes = 8, 32, 64, 5
    x = jax.random.normal(kx, (B, base_dim), dtype=jnp.float32)
    mask = jnp.ones((B,), dtype=jnp.float32)   # unused, mirrors forward(x, mask)
    params = init_params(kp, base_dim, mid_dim, num_classes)
    prepared = prepare_params(params)          # one-time pad/cast (not per call)

    out = classifier_head_2(x, mask, prepared)
    out = jax.block_until_ready(out)

    ref = _reference(x, params)
    assert out.shape == (B, num_classes)
    assert jnp.allclose(out, ref, atol=2e-5, rtol=2e-5), float(jnp.max(jnp.abs(out - ref)))

    print("KERNEL_OK")
</pallas_src>

<mosaic_0001>
module attributes {stable_mosaic.version = 11 : i64} {
  func.func @_mlp_head_kernel(%arg0: i32, %arg1: memref<8x32xf32, #tpu.memory_space<vmem>>, %arg2: memref<32x128xf32, #tpu.memory_space<vmem>>, %arg3: memref<1x128xf32, #tpu.memory_space<vmem>>, %arg4: memref<128x5xf32, #tpu.memory_space<vmem>>, %arg5: memref<1x5xf32, #tpu.memory_space<vmem>>, %arg6: memref<8x5xf32, #tpu.memory_space<vmem>>) attributes {dimension_semantics = [#tpu.dimension_semantics<parallel>], iteration_bounds = array<i64: 1>, scalar_prefetch = 0 : i64, scratch_operands = 0 : i64, tpu.core_type = #tpu.core_type<tc>, window_params = [{transform_indices = @transform_0, window_bounds = array<i64: 8, 32>}, {pipeline_mode = #tpu.pipeline_mode<synchronous>, transform_indices = @transform_1, window_bounds = array<i64: 32, 128>}, {pipeline_mode = #tpu.pipeline_mode<synchronous>, transform_indices = @transform_2, window_bounds = array<i64: 1, 128>}, {pipeline_mode = #tpu.pipeline_mode<synchronous>, transform_indices = @transform_3, window_bounds = array<i64: 128, 5>}, {pipeline_mode = #tpu.pipeline_mode<synchronous>, transform_indices = @transform_4, window_bounds = array<i64: 1, 5>}, {transform_indices = @transform_5, window_bounds = array<i64: 8, 5>}]} {
    %c0 = arith.constant 0 : index
    %c0_0 = arith.constant 0 : index
    %0 = vector.load %arg1[%c0, %c0_0] : memref<8x32xf32, #tpu.memory_space<vmem>>, vector<8x32xf32>
    %c0_1 = arith.constant 0 : index
    %c0_2 = arith.constant 0 : index
    %1 = vector.load %arg2[%c0_1, %c0_2] : memref<32x128xf32, #tpu.memory_space<vmem>>, vector<32x128xf32>
    %cst = arith.constant dense<0.000000e+00> : vector<8x128xf32>
    %2 = tpu.matmul %0, %1, %cst {dimension_numbers = #tpu.dot_dimension_numbers<[1], [0], [0], [1], [0, 0, 1, 1], [], []>, precision = #tpu.contract_precision<fp32>} : vector<8x32xf32>, vector<32x128xf32>, vector<8x128xf32> -> vector<8x128xf32>
    %c0_3 = arith.constant 0 : index
    %c0_4 = arith.constant 0 : index
    %3 = vector.load %arg3[%c0_3, %c0_4] : memref<1x128xf32, #tpu.memory_space<vmem>>, vector<1x128xf32>
    %4 = vector.broadcast %3 : vector<1x128xf32> to vector<8x128xf32>
    %5 = arith.addf %2, %4 : vector<8x128xf32>
    %cst_5 = arith.constant 5.000000e-01 : f32
    %6 = vector.broadcast %cst_5 : f32 to vector<8x128xf32>
    %7 = arith.mulf %6, %5 : vector<8x128xf32>
    %cst_6 = arith.constant 0.707106769 : f32
    %8 = vector.broadcast %cst_6 : f32 to vector<8x128xf32>
    %9 = arith.mulf %5, %8 : vector<8x128xf32>
    %10 = math.erf %9 : vector<8x128xf32>
    %cst_7 = arith.constant 1.000000e+00 : f32
    %11 = vector.broadcast %cst_7 : f32 to vector<8x128xf32>
    %12 = arith.addf %11, %10 : vector<8x128xf32>
    %13 = arith.mulf %7, %12 : vector<8x128xf32>
    %c0_8 = arith.constant 0 : index
    %c0_9 = arith.constant 0 : index
    %14 = vector.load %arg4[%c0_8, %c0_9] : memref<128x5xf32, #tpu.memory_space<vmem>>, vector<128x5xf32>
    %cst_10 = arith.constant dense<0.000000e+00> : vector<8x5xf32>
    %15 = tpu.matmul %13, %14, %cst_10 {dimension_numbers = #tpu.dot_dimension_numbers<[1], [0], [0], [1], [0, 0, 1, 1], [], []>, precision = #tpu.contract_precision<fp32>} : vector<8x128xf32>, vector<128x5xf32>, vector<8x5xf32> -> vector<8x5xf32>
    %c0_11 = arith.constant 0 : index
    %c0_12 = arith.constant 0 : index
    %16 = vector.load %arg5[%c0_11, %c0_12] : memref<1x5xf32, #tpu.memory_space<vmem>>, vector<1x5xf32>
    %17 = vector.broadcast %16 : vector<1x5xf32> to vector<8x5xf32>
    %18 = arith.addf %15, %17 : vector<8x5xf32>
    %c0_13 = arith.constant 0 : index
    %c0_14 = arith.constant 0 : index
    %19 = vector.load %arg6[%c0_13, %c0_14] : memref<8x5xf32, #tpu.memory_space<vmem>>, vector<8x5xf32>
    tpu.vector_store %arg6[%c0_13, %c0_14], %18 {strides = array<i32>} : memref<8x5xf32, #tpu.memory_space<vmem>>, vector<8x5xf32>,
    return
  }
  func.func @transform_0(%arg0: i32) -> (i32, i32) {
    %c0_i32 = arith.constant 0 : i32
    %c0_i32_0 = arith.constant 0 : i32
    return %arg0, %c0_i32 : i32, i32
  }
  func.func @transform_1(%arg0: i32) -> (i32, i32) {
    %c0_i32 = arith.constant 0 : i32
    %c0_i32_0 = arith.constant 0 : i32
    %c0_i32_1 = arith.constant 0 : i32
    return %c0_i32, %c0_i32_0 : i32, i32
  }
  func.func @transform_2(%arg0: i32) -> (i32, i32) {
    %c0_i32 = arith.constant 0 : i32
    %c0_i32_0 = arith.constant 0 : i32
    %c0_i32_1 = arith.constant 0 : i32
    return %c0_i32, %c0_i32_0 : i32, i32
  }
  func.func @transform_3(%arg0: i32) -> (i32, i32) {
    %c0_i32 = arith.constant 0 : i32
    %c0_i32_0 = arith.constant 0 : i32
    %c0_i32_1 = arith.constant 0 : i32
    return %c0_i32, %c0_i32_0 : i32, i32
  }
  func.func @transform_4(%arg0: i32) -> (i32, i32) {
    %c0_i32 = arith.constant 0 : i32
    %c0_i32_0 = arith.constant 0 : i32
    %c0_i32_1 = arith.constant 0 : i32
    return %c0_i32, %c0_i32_0 : i32, i32
  }
  func.func @transform_5(%arg0: i32) -> (i32, i32) {
    %c0_i32 = arith.constant 0 : i32
    %c0_i32_0 = arith.constant 0 : i32
    return %arg0, %c0_i32 : i32, i32
  }
}

</mosaic_0001>

<llo_original>
// kernel: tpu_custom_call.1
$region0: #{tpu_custom_call.1}
  #allocation0 [shape = 'u32[]', space=smem, size = 0x4, offset = 0x4, fixed_abs, tag = 'smem constant byte address 0x4 - core index']
  #allocation1 [shape = 'u32[144,128]{1,0:T(1,128)}', space=vmem, size = 0x12000, scoped, tag = 'internal scratch']
  %s0 = inlined_call_operand.vmem [shape: f32[8,32], index: 0, kind: input, shape index: {}]
  %s1 = inlined_call_operand.vmem [shape: f32[32,128], index: 1, kind: input, shape index: {}]
  %s2 = inlined_call_operand.vmem [shape: f32[1,128], index: 2, kind: input, shape index: {}]
  %s3 = inlined_call_operand.vmem [shape: f32[128,5], index: 3, kind: input, shape index: {}]
  %s4 = inlined_call_operand.vmem [shape: f32[1,5], index: 4, kind: input, shape index: {}]
  %s5 = inlined_call_operand.hbm [shape: f32[8,5], index: 5, kind: output, shape index: {}]
  %s6 = sld [smem:[#allocation0]]
  $region30: #{tpu_custom_call.1} parent=0
    _
  %s8 = ssub.s32 1, %s6
  %s9 = scalar_select 0, %s8, %s6
  $region1: #{tpu_custom_call.1} parent=0
    #allocation2 [shape = 'u8[4096]{0}', space=vmem, size = 0x1000, scoped, tag = 'output window, operand 0, single buffered']
    #allocation3 [shape = 's32[1]{0}', space=sflag, size = 0x4, scoped, tag = 'scoped memory for tpu_custom_call.1']
    %10 = vsyncpa [#allocation3], 0
    // Predicated region
    $region2: #{tpu_custom_call.1} parent=1 // pred_check
      _
    $region3: #{tpu_custom_call.1} parent=1 // pred_check_branch
      %12 = sbr.rel (0) target = $region5
    $region4: #{tpu_custom_call.1} parent=1 // pred_region
      _
    $region5: #{tpu_custom_call.1} parent=1 // pred_fallthru
      _
    // Predicated region
    $region6: #{tpu_custom_call.1} parent=1 // pred_check
      _
    $region7: #{tpu_custom_call.1} parent=1 // pred_check_branch
      %14 = sbr.rel (0) target = $region9
    $region8: #{tpu_custom_call.1} parent=1 // pred_region
      _
    $region9: #{tpu_custom_call.1} parent=1 // pred_fallthru
      _
    // Predicated region
    $region10: #{tpu_custom_call.1} parent=1 // pred_check
      _
    $region11: #{tpu_custom_call.1} parent=1 // pred_check_branch
      %16 = sbr.rel (0) target = $region13
    $region12: #{tpu_custom_call.1} parent=1 // pred_region
      _
    $region13: #{tpu_custom_call.1} parent=1 // pred_fallthru
      _
    // Predicated region
    $region14: #{tpu_custom_call.1} parent=1 // pred_check
      _
    $region15: #{tpu_custom_call.1} parent=1 // pred_check_branch
      %18 = sbr.rel (0) target = $region17
    $region16: #{tpu_custom_call.1} parent=1 // pred_region
      _
    $region17: #{tpu_custom_call.1} parent=1 // pred_fallthru
      _
    // Predicated region
    $region18: #{tpu_custom_call.1} parent=1 // pred_check
      _
    $region19: #{tpu_custom_call.1} parent=1 // pred_check_branch
      %20 = sbr.rel (0) target = $region21
    $region20: #{tpu_custom_call.1} parent=1 // pred_region
      _
    $region21: #{tpu_custom_call.1} parent=1 // pred_fallthru
      _
    %v21 = vld [vmem:[%s0] sm:$0xff]
    %v22 = vld [vmem:[%s1] sm:$0xff]
    %v23 = vld [vmem:[%s1 + $0x8] sm:$0xff]
    %v24 = vld [vmem:[%s1 + $0x10] sm:$0xff]
    %v25 = vld [vmem:[%s1 + $0x18] sm:$0xff]
    %v26 = vld [vmem:[%s2] sm:$0x1]
    %v28 = vlaneseq
    %v29 = vshrl.u32 %v28, 7
    %v30 = vsub.s32 0, %v29
    %v31 = vrot.slane %v26, %v30
    %vm33 = vcmask 261120
    %v35 = vsel %vm33, %v21, 0
    %37 = vmatprep.subr.mxu0 0.0
    %38 = vmatpush1.msra.mxu0 0.0
    %39 = vmatprep.subr.mxu0 0.0
    %40 = vmatpush1.msra.mxu0 0.0
    %41 = vmatprep.subr.mxu0 0.0
    %42 = vmatpush1.msra.mxu0 0.0
    %43 = vmatprep.subr.mxu0 0.0
    %44 = vmatpush1.msra.mxu0 0.0
    %45 = vmatprep.subr.mxu0 0.0
    %46 = vmatpush1.msra.mxu0 0.0
    %47 = vmatprep.subr.mxu0 0.0
    %48 = vmatpush1.msra.mxu0 0.0
    %49 = vmatprep.subr.mxu0 0.0
    %50 = vmatpush1.msra.mxu0 0.0
    %51 = vmatprep.subr.mxu0 0.0
    %52 = vmatpush1.msra.mxu0 0.0
    %53 = vmatprep.subr.mxu0 0.0
    %54 = vmatpush1.msra.mxu0 0.0
    %55 = vmatprep.subr.mxu0 0.0
    %56 = vmatpush1.msra.mxu0 0.0
    %57 = vmatprep.subr.mxu0 0.0
    %58 = vmatpush1.msra.mxu0 0.0
    %59 = vmatprep.subr.mxu0 0.0
    %60 = vmatpush1.msra.mxu0 0.0
    %61 = vmatprep.subr.mxu0 0.0
    %v62 = vand.u32 %v25, 4294901760
    %63 = vmatpush1.msra.mxu0 %v62
    %64 = vmatprep.subr.mxu0 0.0
    %v65 = vand.u32 %v24, 4294901760
    %66 = vmatpush1.msra.mxu0 %v65
    %67 = vmatprep.subr.mxu0 0.0
    %v68 = vand.u32 %v23, 4294901760
    %69 = vmatpush1.msra.mxu0 %v68
    %70 = vmatprep.subr.mxu0 0.0
    %v71 = vand.u32 %v22, 4294901760
    %72 = vmatpush1.msra.mxu0 %v71
    %73 = vmatprep.subr.mxu0 0.0
    %74 = vmatpush2.msra.mxu0 0.0
    %75 = vmatprep.subr.mxu0 0.0
    %76 = vmatpush2.msra.mxu0 0.0
    %77 = vmatprep.subr.mxu0 0.0
    %78 = vmatpush2.msra.mxu0 0.0
    %79 = vmatprep.subr.mxu0 0.0
    %80 = vmatpush2.msra.mxu0 0.0
    %81 = vmatprep.subr.mxu0 0.0
    %82 = vmatpush2.msra.mxu0 0.0
    %83 = vmatprep.subr.mxu0 0.0
    %84 = vmatpush2.msra.mxu0 0.0
    %85 = vmatprep.subr.mxu0 0.0
    %86 = vmatpush2.msra.mxu0 0.0
    %87 = vmatprep.subr.mxu0 0.0
    %88 = vmatpush2.msra.mxu0 0.0
    %89 = vmatprep.subr.mxu0 0.0
    %90 = vmatpush2.msra.mxu0 0.0
    %91 = vmatprep.subr.mxu0 0.0
    %92 = vmatpush2.msra.mxu0 0.0
    %93 = vmatprep.subr.mxu0 0.0
    %94 = vmatpush2.msra.mxu0 0.0
    %95 = vmatprep.subr.mxu0 0.0
    %96 = vmatpush2.msra.mxu0 0.0
    %97 = vmatprep.subr.mxu0 0.0
    %98 = vmatpush2.msra.mxu0 0.0
    %99 = vmatprep.subr.mxu0 0.0
    %100 = vmatpush2.msra.mxu0 0.0
    %101 = vmatprep.subr.mxu0 0.0
    %102 = vmatpush2.msra.mxu0 0.0
    %103 = vmatprep.subr.mxu0 0.0
    %104 = vmatpush2.msra.mxu0 0.0
    %105 = vmatprep.mubr.f32.mxu0 0.0
    %v106 = vand.u32 %v35, 4294901760
    %v107 = vsub.f32 %v35, %v106
    %v108 = vand.u32 %v107, 4294901760
    %v109 = vsub.f32 %v107, %v108
    %v110 = vand.u32 %v109, 4294901760
    %111 = vmatmul.mubr.f32.gmra.mxu0 %v110
    %v112 = vpop.f32.mrf.mxu0
    %v113 = vadd.f32 %v31, %v112
    %v114 = vpop.f32.mrf.mxu0
    %115 = vdwg.mxu0
    %116 = vmatprep.subr.mxu0 0.0
    %117 = vmatpush1.msra.mxu0 0.0
    %118 = vmatprep.subr.mxu0 0.0
    %119 = vmatpush1.msra.mxu0 0.0
    %120 = vmatprep.subr.mxu0 0.0
    %121 = vmatpush1.msra.mxu0 0.0
    %122 = vmatprep.subr.mxu0 0.0
    %123 = vmatpush1.msra.mxu0 0.0
    %124 = vmatprep.subr.mxu0 0.0
    %125 = vmatpush1.msra.mxu0 0.0
    %126 = vmatprep.subr.mxu0 0.0
    %127 = vmatpush1.msra.mxu0 0.0
    %128 = vmatprep.subr.mxu0 0.0
    %129 = vmatpush1.msra.mxu0 0.0
    %130 = vmatprep.subr.mxu0 0.0
    %131 = vmatpush1.msra.mxu0 0.0
    %132 = vmatprep.subr.mxu0 0.0
    %133 = vmatpush1.msra.mxu0 0.0
    %134 = vmatprep.subr.mxu0 0.0
    %135 = vmatpush1.msra.mxu0 0.0
    %136 = vmatprep.subr.mxu0 0.0
    %137 = vmatpush1.msra.mxu0 0.0
    %138 = vmatprep.subr.mxu0 0.0
    %139 = vmatpush1.msra.mxu0 0.0
    %140 = vmatprep.subr.mxu0 0.0
    %v141 = vand.u32 %v25, 4294901760
    %v142 = vsub.f32 %v25, %v141
    %v143 = vand.u32 %v142, 4294901760
    %v144 = vsub.f32 %v142, %v143
    %v145 = vand.u32 %v144, 4294901760
    %146 = vmatpush1.msra.mxu0 %v145
    %147 = vmatprep.subr.mxu0 0.0
    %v148 = vand.u32 %v24, 4294901760
    %v149 = vsub.f32 %v24, %v148
    %v150 = vand.u32 %v149, 4294901760
    %v151 = vsub.f32 %v149, %v150
    %v152 = vand.u32 %v151, 4294901760
    %153 = vmatpush1.msra.mxu0 %v152
    %154 = vmatprep.subr.mxu0 0.0
    %v155 = vand.u32 %v23, 4294901760
    %v156 = vsub.f32 %v23, %v155
    %v157 = vand.u32 %v156, 4294901760
    %v158 = vsub.f32 %v156, %v157
    %v159 = vand.u32 %v158, 4294901760
    %160 = vmatpush1.msra.mxu0 %v159
    %161 = vmatprep.subr.mxu0 0.0
    %v162 = vand.u32 %v22, 4294901760
    %v163 = vsub.f32 %v22, %v162
    %v164 = vand.u32 %v163, 4294901760
    %v165 = vsub.f32 %v163, %v164
    %v166 = vand.u32 %v165, 4294901760
    %167 = vmatpush1.msra.mxu0 %v166
    %168 = vmatprep.subr.mxu0 0.0
    %169 = vmatpush2.msra.mxu0 0.0
    %170 = vmatprep.subr.mxu0 0.0
    %171 = vmatpush2.msra.mxu0 0.0
    %172 = vmatprep.subr.mxu0 0.0
    %173 = vmatpush2.msra.mxu0 0.0
    %174 = vmatprep.subr.mxu0 0.0
    %175 = vmatpush2.msra.mxu0 0.0
    %176 = vmatprep.subr.mxu0 0.0
    %177 = vmatpush2.msra.mxu0 0.0
    %178 = vmatprep.subr.mxu0 0.0
    %179 = vmatpush2.msra.mxu0 0.0
    %180 = vmatprep.subr.mxu0 0.0
    %181 = vmatpush2.msra.mxu0 0.0
    %182 = vmatprep.subr.mxu0 0.0
    %183 = vmatpush2.msra.mxu0 0.0
    %184 = vmatprep.subr.mxu0 0.0
    %185 = vmatpush2.msra.mxu0 0.0
    %186 = vmatprep.subr.mxu0 0.0
    %187 = vmatpush2.msra.mxu0 0.0
    %188 = vmatprep.subr.mxu0 0.0
    %189 = vmatpush2.msra.mxu0 0.0
    %190 = vmatprep.subr.mxu0 0.0
    %191 = vmatpush2.msra.mxu0 0.0
    %192 = vmatprep.subr.mxu0 0.0
    %193 = vmatpush2.msra.mxu0 0.0
    %194 = vmatprep.subr.mxu0 0.0
    %195 = vmatpush2.msra.mxu0 0.0
    %196 = vmatprep.subr.mxu0 0.0
    %197 = vmatpush2.msra.mxu0 0.0
    %198 = vmatprep.subr.mxu0 0.0
    %199 = vmatpush2.msra.mxu0 0.0
    %200 = vmatprep.mubr.f32.mxu0 0.0
    %v201 = vand.u32 %v35, 4294901760
    %202 = vmatmul.mubr.f32.gmra.mxu0 %v201
    %v203 = vpop.f32.mrf.mxu0
    %v204 = vadd.f32 %v113, %v203
    %v205 = vpop.f32.mrf.mxu0
    %206 = vdwg.mxu0
    %207 = vmatprep.subr.mxu0 0.0
    %208 = vmatpush1.msra.mxu0 0.0
    %209 = vmatprep.subr.mxu0 0.0
    %210 = vmatpush1.msra.mxu0 0.0
    %211 = vmatprep.subr.mxu0 0.0
    %212 = vmatpush1.msra.mxu0 0.0
    %213 = vmatprep.subr.mxu0 0.0
    %214 = vmatpush1.msra.mxu0 0.0
    %215 = vmatprep.subr.mxu0 0.0
    %216 = vmatpush1.msra.mxu0 0.0
    %217 = vmatprep.subr.mxu0 0.0
    %218 = vmatpush1.msra.mxu0 0.0
    %219 = vmatprep.subr.mxu0 0.0
    %220 = vmatpush1.msra.mxu0 0.0
    %221 = vmatprep.subr.mxu0 0.0
    %222 = vmatpush1.msra.mxu0 0.0
    %223 = vmatprep.subr.mxu0 0.0
    %224 = vmatpush1.msra.mxu0 0.0
    %225 = vmatprep.subr.mxu0 0.0
    %226 = vmatpush1.msra.mxu0 0.0
    %227 = vmatprep.subr.mxu0 0.0
    %228 = vmatpush1.msra.mxu0 0.0
    %229 = vmatprep.subr.mxu0 0.0
    %230 = vmatpush1.msra.mxu0 0.0
    %231 = vmatprep.subr.mxu0 0.0
    %v232 = vand.u32 %v25, 4294901760
    %v233 = vsub.f32 %v25, %v232
    %234 = vmatpush1.msra.mxu0 %v233
    %235 = vmatprep.subr.mxu0 0.0
    %v236 = vand.u32 %v24, 4294901760
    %v237 = vsub.f32 %v24, %v236
    %238 = vmatpush1.msra.mxu0 %v237
    %239 = vmatprep.subr.mxu0 0.0
    %v240 = vand.u32 %v23, 4294901760
    %v241 = vsub.f32 %v23, %v240
    %242 = vmatpush1.msra.mxu0 %v241
    %243 = vmatprep.subr.mxu0 0.0
    %v244 = vand.u32 %v22, 4294901760
    %v245 = vsub.f32 %v22, %v244
    %246 = vmatpush1.msra.mxu0 %v245
    %247 = vmatprep.subr.mxu0 0.0
    %248 = vmatpush2.msra.mxu0 0.0
    %249 = vmatprep.subr.mxu0 0.0
    %250 = vmatpush2.msra.mxu0 0.0
    %251 = vmatprep.subr.mxu0 0.0
    %252 = vmatpush2.msra.mxu0 0.0
    %253 = vmatprep.subr.mxu0 0.0
    %254 = vmatpush2.msra.mxu0 0.0
    %255 = vmatprep.subr.mxu0 0.0
    %256 = vmatpush2.msra.mxu0 0.0
    %257 = vmatprep.subr.mxu0 0.0
    %258 = vmatpush2.msra.mxu0 0.0
    %259 = vmatprep.subr.mxu0 0.0
    %260 = vmatpush2.msra.mxu0 0.0
    %261 = vmatprep.subr.mxu0 0.0
    %262 = vmatpush2.msra.mxu0 0.0
    %263 = vmatprep.subr.mxu0 0.0
    %264 = vmatpush2.msra.mxu0 0.0
    %265 = vmatprep.subr.mxu0 0.0
    %266 = vmatpush2.msra.mxu0 0.0
    %267 = vmatprep.subr.mxu0 0.0
    %268 = vmatpush2.msra.mxu0 0.0
    %269 = vmatprep.subr.mxu0 0.0
    %270 = vmatpush2.msra.mxu0 0.0
    %271 = vmatprep.subr.mxu0 0.0
    %272 = vmatpush2.msra.mxu0 0.0
    %273 = vmatprep.subr.mxu0 0.0
    %274 = vmatpush2.msra.mxu0 0.0
    %275 = vmatprep.subr.mxu0 0.0
    %276 = vmatpush2.msra.mxu0 0.0
    %277 = vmatprep.subr.mxu0 0.0
    %278 = vmatpush2.msra.mxu0 0.0
    %279 = vmatprep.mubr.f32.mxu0 0.0
    %v280 = vand.u32 %v35, 4294901760
    %v281 = vsub.f32 %v35, %v280
    %282 = vmatmul.mubr.f32.gmra.mxu0 %v281
    %v283 = vpop.f32.mrf.mxu0
    %v284 = vadd.f32 %v204, %v283
    %v285 = vpop.f32.mrf.mxu0
    %286 = vdwg.mxu0
    %287 = vmatprep.subr.mxu0 0.0
    %288 = vmatpush1.msra.mxu0 0.0
    %289 = vmatprep.subr.mxu0 0.0
    %290 = vmatpush1.msra.mxu0 0.0
    %291 = vmatprep.subr.mxu0 0.0
    %292 = vmatpush1.msra.mxu0 0.0
    %293 = vmatprep.subr.mxu0 0.0
    %294 = vmatpush1.msra.mxu0 0.0
    %295 = vmatprep.subr.mxu0 0.0
    %296 = vmatpush1.msra.mxu0 0.0
    %297 = vmatprep.subr.mxu0 0.0
    %298 = vmatpush1.msra.mxu0 0.0
    %299 = vmatprep.subr.mxu0 0.0
    %300 = vmatpush1.msra.mxu0 0.0
    %301 = vmatprep.subr.mxu0 0.0
    %302 = vmatpush1.msra.mxu0 0.0
    %303 = vmatprep.subr.mxu0 0.0
    %304 = vmatpush1.msra.mxu0 0.0
    %305 = vmatprep.subr.mxu0 0.0
    %306 = vmatpush1.msra.mxu0 0.0
    %307 = vmatprep.subr.mxu0 0.0
    %308 = vmatpush1.msra.mxu0 0.0
    %309 = vmatprep.subr.mxu0 0.0
    %310 = vmatpush1.msra.mxu0 0.0
    %311 = vmatprep.subr.mxu0 0.0
    %v312 = vand.u32 %v25, 4294901760
    %313 = vmatpush1.msra.mxu0 %v312
    %314 = vmatprep.subr.mxu0 0.0
    %v315 = vand.u32 %v24, 4294901760
    %316 = vmatpush1.msra.mxu0 %v315
    %317 = vmatprep.subr.mxu0 0.0
    %v318 = vand.u32 %v23, 4294901760
    %319 = vmatpush1.msra.mxu0 %v318
    %320 = vmatprep.subr.mxu0 0.0
    %v321 = vand.u32 %v22, 4294901760
    %322 = vmatpush1.msra.mxu0 %v321
    %323 = vmatprep.subr.mxu0 0.0
    %324 = vmatpush2.msra.mxu0 0.0
    %325 = vmatprep.subr.mxu0 0.0
    %326 = vmatpush2.msra.mxu0 0.0
    %327 = vmatprep.subr.mxu0 0.0
    %328 = vmatpush2.msra.mxu0 0.0
    %329 = vmatprep.subr.mxu0 0.0
    %330 = vmatpush2.msra.mxu0 0.0
    %331 = vmatprep.subr.mxu0 0.0
    %332 = vmatpush2.msra.mxu0 0.0
    %333 = vmatprep.subr.mxu0 0.0
    %334 = vmatpush2.msra.mxu0 0.0
    %335 = vmatprep.subr.mxu0 0.0
    %336 = vmatpush2.msra.mxu0 0.0
    %337 = vmatprep.subr.mxu0 0.0
    %338 = vmatpush2.msra.mxu0 0.0
    %339 = vmatprep.subr.mxu0 0.0
    %340 = vmatpush2.msra.mxu0 0.0
    %341 = vmatprep.subr.mxu0 0.0
    %342 = vmatpush2.msra.mxu0 0.0
    %343 = vmatprep.subr.mxu0 0.0
    %344 = vmatpush2.msra.mxu0 0.0
    %345 = vmatprep.subr.mxu0 0.0
    %346 = vmatpush2.msra.mxu0 0.0
    %347 = vmatprep.subr.mxu0 0.0
    %348 = vmatpush2.msra.mxu0 0.0
    %349 = vmatprep.subr.mxu0 0.0
    %350 = vmatpush2.msra.mxu0 0.0
    %351 = vmatprep.subr.mxu0 0.0
    %352 = vmatpush2.msra.mxu0 0.0
    %353 = vmatprep.subr.mxu0 0.0
    %354 = vmatpush2.msra.mxu0 0.0
    %355 = vmatprep.mubr.f32.mxu0 0.0
    %v356 = vand.u32 %v35, 4294901760
    %v357 = vsub.f32 %v35, %v356
    %v358 = vand.u32 %v357, 4294901760
    %359 = vmatmul.mubr.f32.gmra.mxu0 %v358
    %v360 = vpop.f32.mrf.mxu0
    %v361 = vadd.f32 %v284, %v360
    %v362 = vpop.f32.mrf.mxu0
    %363 = vdwg.mxu0
    %364 = vmatprep.subr.mxu0 0.0
    %365 = vmatpush1.msra.mxu0 0.0
    %366 = vmatprep.subr.mxu0 0.0
    %367 = vmatpush1.msra.mxu0 0.0
    %368 = vmatprep.subr.mxu0 0.0
    %369 = vmatpush1.msra.mxu0 0.0
    %370 = vmatprep.subr.mxu0 0.0
    %371 = vmatpush1.msra.mxu0 0.0
    %372 = vmatprep.subr.mxu0 0.0
    %373 = vmatpush1.msra.mxu0 0.0
    %374 = vmatprep.subr.mxu0 0.0
    %375 = vmatpush1.msra.mxu0 0.0
    %376 = vmatprep.subr.mxu0 0.0
    %377 = vmatpush1.msra.mxu0 0.0
    %378 = vmatprep.subr.mxu0 0.0
    %379 = vmatpush1.msra.mxu0 0.0
    %380 = vmatprep.subr.mxu0 0.0
    %381 = vmatpush1.msra.mxu0 0.0
    %382 = vmatprep.subr.mxu0 0.0
    %383 = vmatpush1.msra.mxu0 0.0
    %384 = vmatprep.subr.mxu0 0.0
    %385 = vmatpush1.msra.mxu0 0.0
    %386 = vmatprep.subr.mxu0 0.0
    %387 = vmatpush1.msra.mxu0 0.0
    %388 = vmatprep.subr.mxu0 0.0
    %v389 = vand.u32 %v25, 4294901760
    %v390 = vsub.f32 %v25, %v389
    %v391 = vand.u32 %v390, 4294901760
    %392 = vmatpush1.msra.mxu0 %v391
    %393 = vmatprep.subr.mxu0 0.0
    %v394 = vand.u32 %v24, 4294901760
    %v395 = vsub.f32 %v24, %v394
    %v396 = vand.u32 %v395, 4294901760
    %397 = vmatpush1.msra.mxu0 %v396
    %398 = vmatprep.subr.mxu0 0.0
    %v399 = vand.u32 %v23, 4294901760
    %v400 = vsub.f32 %v23, %v399
    %v401 = vand.u32 %v400, 4294901760
    %402 = vmatpush1.msra.mxu0 %v401
    %403 = vmatprep.subr.mxu0 0.0
    %v404 = vand.u32 %v22, 4294901760
    %v405 = vsub.f32 %v22, %v404
    %v406 = vand.u32 %v405, 4294901760
    %407 = vmatpush1.msra.mxu0 %v406
    %408 = vmatprep.subr.mxu0 0.0
    %409 = vmatpush2.msra.mxu0 0.0
    %410 = vmatprep.subr.mxu0 0.0
    %411 = vmatpush2.msra.mxu0 0.0
    %412 = vmatprep.subr.mxu0 0.0
    %413 = vmatpush2.msra.mxu0 0.0
    %414 = vmatprep.subr.mxu0 0.0
    %415 = vmatpush2.msra.mxu0 0.0
    %416 = vmatprep.subr.mxu0 0.0
    %417 = vmatpush2.msra.mxu0 0.0
    %418 = vmatprep.subr.mxu0 0.0
    %419 = vmatpush2.msra.mxu0 0.0
    %420 = vmatprep.subr.mxu0 0.0
    %421 = vmatpush2.msra.mxu0 0.0
    %422 = vmatprep.subr.mxu0 0.0
    %423 = vmatpush2.msra.mxu0 0.0
    %424 = vmatprep.subr.mxu0 0.0
    %425 = vmatpush2.msra.mxu0 0.0
    %426 = vmatprep.subr.mxu0 0.0
    %427 = vmatpush2.msra.mxu0 0.0
    %428 = vmatprep.subr.mxu0 0.0
    %429 = vmatpush2.msra.mxu0 0.0
    %430 = vmatprep.subr.mxu0 0.0
    %431 = vmatpush2.msra.mxu0 0.0
    %432 = vmatprep.subr.mxu0 0.0
    %433 = vmatpush2.msra.mxu0 0.0
    %434 = vmatprep.subr.mxu0 0.0
    %435 = vmatpush2.msra.mxu0 0.0
    %436 = vmatprep.subr.mxu0 0.0
    %437 = vmatpush2.msra.mxu0 0.0
    %438 = vmatprep.subr.mxu0 0.0
    %439 = vmatpush2.msra.mxu0 0.0
    %440 = vmatprep.mubr.f32.mxu0 0.0
    %v441 = vand.u32 %v35, 4294901760
    %442 = vmatmul.mubr.f32.gmra.mxu0 %v441
    %v443 = vpop.f32.mrf.mxu0
    %v444 = vadd.f32 %v361, %v443
    %v445 = vpop.f32.mrf.mxu0
    %446 = vdwg.mxu0
    %447 = vmatprep.subr.mxu0 0.0
    %448 = vmatpush1.msra.mxu0 0.0
    %449 = vmatprep.subr.mxu0 0.0
    %450 = vmatpush1.msra.mxu0 0.0
    %451 = vmatprep.subr.mxu0 0.0
    %452 = vmatpush1.msra.mxu0 0.0
    %453 = vmatprep.subr.mxu0 0.0
    %454 = vmatpush1.msra.mxu0 0.0
    %455 = vmatprep.subr.mxu0 0.0
    %456 = vmatpush1.msra.mxu0 0.0
    %457 = vmatprep.subr.mxu0 0.0
    %458 = vmatpush1.msra.mxu0 0.0
    %459 = vmatprep.subr.mxu0 0.0
    %460 = vmatpush1.msra.mxu0 0.0
    %461 = vmatprep.subr.mxu0 0.0
    %462 = vmatpush1.msra.mxu0 0.0
    %463 = vmatprep.subr.mxu0 0.0
    %464 = vmatpush1.msra.mxu0 0.0
    %465 = vmatprep.subr.mxu0 0.0
    %466 = vmatpush1.msra.mxu0 0.0
    %467 = vmatprep.subr.mxu0 0.0
    %468 = vmatpush1.msra.mxu0 0.0
    %469 = vmatprep.subr.mxu0 0.0
    %470 = vmatpush1.msra.mxu0 0.0
    %471 = vmatprep.subr.mxu0 0.0
    %v472 = vand.u32 %v25, 4294901760
    %473 = vmatpush1.msra.mxu0 %v472
    %474 = vmatprep.subr.mxu0 0.0
    %v475 = vand.u32 %v24, 4294901760
    %476 = vmatpush1.msra.mxu0 %v475
    %477 = vmatprep.subr.mxu0 0.0
    %v478 = vand.u32 %v23, 4294901760
    %479 = vmatpush1.msra.mxu0 %v478
    %480 = vmatprep.subr.mxu0 0.0
    %v481 = vand.u32 %v22, 4294901760
    %482 = vmatpush1.msra.mxu0 %v481
    %483 = vmatprep.subr.mxu0 0.0
    %484 = vmatpush2.msra.mxu0 0.0
    %485 = vmatprep.subr.mxu0 0.0
    %486 = vmatpush2.msra.mxu0 0.0
    %487 = vmatprep.subr.mxu0 0.0
    %488 = vmatpush2.msra.mxu0 0.0
    %489 = vmatprep.subr.mxu0 0.0
    %490 = vmatpush2.msra.mxu0 0.0
    %491 = vmatprep.subr.mxu0 0.0
    %492 = vmatpush2.msra.mxu0 0.0
    %493 = vmatprep.subr.mxu0 0.0
    %494 = vmatpush2.msra.mxu0 0.0
    %495 = vmatprep.subr.mxu0 0.0
    %496 = vmatpush2.msra.mxu0 0.0
    %497 = vmatprep.subr.mxu0 0.0
    %498 = vmatpush2.msra.mxu0 0.0
    %499 = vmatprep.subr.mxu0 0.0
    %500 = vmatpush2.msra.mxu0 0.0
    %501 = vmatprep.subr.mxu0 0.0
    %502 = vmatpush2.msra.mxu0 0.0
    %503 = vmatprep.subr.mxu0 0.0
    %504 = vmatpush2.msra.mxu0 0.0
    %505 = vmatprep.subr.mxu0 0.0
    %506 = vmatpush2.msra.mxu0 0.0
    %507 = vmatprep.subr.mxu0 0.0
    %508 = vmatpush2.msra.mxu0 0.0
    %509 = vmatprep.subr.mxu0 0.0
    %510 = vmatpush2.msra.mxu0 0.0
    %511 = vmatprep.subr.mxu0 0.0
    %512 = vmatpush2.msra.mxu0 0.0
    %513 = vmatprep.subr.mxu0 0.0
    %514 = vmatpush2.msra.mxu0 0.0
    %515 = vmatprep.mubr.f32.mxu0 0.0
    %v516 = vand.u32 %v35, 4294901760
    %517 = vmatmul.mubr.f32.gmra.mxu0 %v516
    %v518 = vpop.f32.mrf.mxu0
    %v519 = vadd.f32 %v444, %v518
    %v520 = vpop.f32.mrf.mxu0
    %521 = vdwg.mxu0
    %v522 = vmul.f32 %v519, 0.5
    %v523 = vmul.f32 %v519, 0.70710677
    %v524 = verf.f32.pop %v523
    %v525 = vadd.f32 %v524, 1.0
    %v526 = vmul.f32 %v522, %v525
    %v527 = vld [vmem:[%s3] sm:$0xff]
    %v528 = vld [vmem:[%s3 + $0x8] sm:$0xff]
    %v529 = vld [vmem:[%s3 + $0x10] sm:$0xff]
    %v530 = vld [vmem:[%s3 + $0x18] sm:$0xff]
    %v531 = vld [vmem:[%s3 + $0x20] sm:$0xff]
    %v532 = vld [vmem:[%s3 + $0x28] sm:$0xff]
    %v533 = vld [vmem:[%s3 + $0x30] sm:$0xff]
    %v534 = vld [vmem:[%s3 + $0x38] sm:$0xff]
    %v535 = vld [vmem:[%s3 + $0x40] sm:$0xff]
    %v536 = vld [vmem:[%s3 + $0x48] sm:$0xff]
    %v537 = vld [vmem:[%s3 + $0x50] sm:$0xff]
    %v538 = vld [vmem:[%s3 + $0x58] sm:$0xff]
    %v539 = vld [vmem:[%s3 + $0x60] sm:$0xff]
    %v540 = vld [vmem:[%s3 + $0x68] sm:$0xff]
    %v541 = vld [vmem:[%s3 + $0x70] sm:$0xff]
    %v542 = vld [vmem:[%s3 + $0x78] sm:$0xff]
    %v543 = vld [vmem:[%s4] sm:$0x1]
    %v545 = vlaneseq
    %v546 = vshrl.u32 %v545, 7
    %v547 = vsub.s32 0, %v546
    %v548 = vrot.slane %v543, %v547
    %550 = vmatprep.subr.mxu0 0.0
    %v551 = vand.u32 %v542, 4294901760
    %552 = vmatpush1.msra.mxu0 %v551
    %553 = vmatprep.subr.mxu0 0.0
    %v554 = vand.u32 %v541, 4294901760
    %555 = vmatpush1.msra.mxu0 %v554
    %556 = vmatprep.subr.mxu0 0.0
    %v557 = vand.u32 %v540, 4294901760
    %558 = vmatpush1.msra.mxu0 %v557
    %559 = vmatprep.subr.mxu0 0.0
    %v560 = vand.u32 %v539, 4294901760
    %561 = vmatpush1.msra.mxu0 %v560
    %562 = vmatprep.subr.mxu0 0.0
    %v563 = vand.u32 %v538, 4294901760
    %564 = vmatpush1.msra.mxu0 %v563
    %565 = vmatprep.subr.mxu0 0.0
    %v566 = vand.u32 %v537, 4294901760
    %567 = vmatpush1.msra.mxu0 %v566
    %568 = vmatprep.subr.mxu0 0.0
    %v569 = vand.u32 %v536, 4294901760
    %570 = vmatpush1.msra.mxu0 %v569
    %571 = vmatprep.subr.mxu0 0.0
    %v572 = vand.u32 %v535, 4294901760
    %573 = vmatpush1.msra.mxu0 %v572
    %574 = vmatprep.subr.mxu0 0.0
    %v575 = vand.u32 %v534, 4294901760
    %576 = vmatpush1.msra.mxu0 %v575
    %577 = vmatprep.subr.mxu0 0.0
    %v578 = vand.u32 %v533, 4294901760
    %579 = vmatpush1.msra.mxu0 %v578
    %580 = vmatprep.subr.mxu0 0.0
    %v581 = vand.u32 %v532, 4294901760
    %582 = vmatpush1.msra.mxu0 %v581
    %583 = vmatprep.subr.mxu0 0.0
    %v584 = vand.u32 %v531, 4294901760
    %585 = vmatpush1.msra.mxu0 %v584
    %586 = vmatprep.subr.mxu0 0.0
    %v587 = vand.u32 %v530, 4294901760
    %588 = vmatpush1.msra.mxu0 %v587
    %589 = vmatprep.subr.mxu0 0.0
    %v590 = vand.u32 %v529, 4294901760
    %591 = vmatpush1.msra.mxu0 %v590
    %592 = vmatprep.subr.mxu0 0.0
    %v593 = vand.u32 %v528, 4294901760
    %594 = vmatpush1.msra.mxu0 %v593
    %595 = vmatprep.subr.mxu0 0.0
    %v596 = vand.u32 %v527, 4294901760
    %597 = vmatpush1.msra.mxu0 %v596
    %598 = vmatprep.subr.mxu0 0.0
    %599 = vmatpush2.msra.mxu0 0.0
    %600 = vmatprep.subr.mxu0 0.0
    %601 = vmatpush2.msra.mxu0 0.0
    %602 = vmatprep.subr.mxu0 0.0
    %603 = vmatpush2.msra.mxu0 0.0
    %604 = vmatprep.subr.mxu0 0.0
    %605 = vmatpush2.msra.mxu0 0.0
    %606 = vmatprep.subr.mxu0 0.0
    %607 = vmatpush2.msra.mxu0 0.0
    %608 = vmatprep.subr.mxu0 0.0
    %609 = vmatpush2.msra.mxu0 0.0
    %610 = vmatprep.subr.mxu0 0.0
    %611 = vmatpush2.msra.mxu0 0.0
    %612 = vmatprep.subr.mxu0 0.0
    %613 = vmatpush2.msra.mxu0 0.0
    %614 = vmatprep.subr.mxu0 0.0
    %615 = vmatpush2.msra.mxu0 0.0
    %616 = vmatprep.subr.mxu0 0.0
    %617 = vmatpush2.msra.mxu0 0.0
    %618 = vmatprep.subr.mxu0 0.0
    %619 = vmatpush2.msra.mxu0 0.0
    %620 = vmatprep.subr.mxu0 0.0
    %621 = vmatpush2.msra.mxu0 0.0
    %622 = vmatprep.subr.mxu0 0.0
    %623 = vmatpush2.msra.mxu0 0.0
    %624 = vmatprep.subr.mxu0 0.0
    %625 = vmatpush2.msra.mxu0 0.0
    %626 = vmatprep.subr.mxu0 0.0
    %627 = vmatpush2.msra.mxu0 0.0
    %628 = vmatprep.subr.mxu0 0.0
    %629 = vmatpush2.msra.mxu0 0.0
    %630 = vmatprep.mubr.f32.mxu0 0.0
    %v631 = vand.u32 %v526, 4294901760
    %v632 = vsub.f32 %v526, %v631
    %v633 = vand.u32 %v632, 4294901760
    %v634 = vsub.f32 %v632, %v633
    %v635 = vand.u32 %v634, 4294901760
    %636 = vmatmul.mubr.f32.gmra.mxu0 %v635
    %v637 = vpop.f32.mrf.mxu0
    %v638 = vadd.f32 %v548, %v637
    %v639 = vpop.f32.mrf.mxu0
    %640 = vdwg.mxu0
    %641 = vmatprep.subr.mxu0 0.0
    %v642 = vand.u32 %v542, 4294901760
    %v643 = vsub.f32 %v542, %v642
    %v644 = vand.u32 %v643, 4294901760
    %v645 = vsub.f32 %v643, %v644
    %v646 = vand.u32 %v645, 4294901760
    %647 = vmatpush1.msra.mxu0 %v646
    %648 = vmatprep.subr.mxu0 0.0
    %v649 = vand.u32 %v541, 4294901760
    %v650 = vsub.f32 %v541, %v649
    %v651 = vand.u32 %v650, 4294901760
    %v652 = vsub.f32 %v650, %v651
    %v653 = vand.u32 %v652, 4294901760
    %654 = vmatpush1.msra.mxu0 %v653
    %655 = vmatprep.subr.mxu0 0.0
    %v656 = vand.u32 %v540, 4294901760
    %v657 = vsub.f32 %v540, %v656
    %v658 = vand.u32 %v657, 4294901760
    %v659 = vsub.f32 %v657, %v658
    %v660 = vand.u32 %v659, 4294901760
    %661 = vmatpush1.msra.mxu0 %v660
    %662 = vmatprep.subr.mxu0 0.0
    %v663 = vand.u32 %v539, 4294901760
    %v664 = vsub.f32 %v539, %v663
    %v665 = vand.u32 %v664, 4294901760
    %v666 = vsub.f32 %v664, %v665
    %v667 = vand.u32 %v666, 4294901760
    %668 = vmatpush1.msra.mxu0 %v667
    %669 = vmatprep.subr.mxu0 0.0
    %v670 = vand.u32 %v538, 4294901760
    %v671 = vsub.f32 %v538, %v670
    %v672 = vand.u32 %v671, 4294901760
    %v673 = vsub.f32 %v671, %v672
    %v674 = vand.u32 %v673, 4294901760
    %675 = vmatpush1.msra.mxu0 %v674
    %676 = vmatprep.subr.mxu0 0.0
    %v677 = vand.u32 %v537, 4294901760
    %v678 = vsub.f32 %v537, %v677
    %v679 = vand.u32 %v678, 4294901760
    %v680 = vsub.f32 %v678, %v679
    %v681 = vand.u32 %v680, 4294901760
    %682 = vmatpush1.msra.mxu0 %v681
    %683 = vmatprep.subr.mxu0 0.0
    %v684 = vand.u32 %v536, 4294901760
    %v685 = vsub.f32 %v536, %v684
    %v686 = vand.u32 %v685, 4294901760
    %v687 = vsub.f32 %v685, %v686
    %v688 = vand.u32 %v687, 4294901760
    %689 = vmatpush1.msra.mxu0 %v688
    %690 = vmatprep.subr.mxu0 0.0
    %v691 = vand.u32 %v535, 4294901760
    %v692 = vsub.f32 %v535, %v691
    %v693 = vand.u32 %v692, 4294901760
    %v694 = vsub.f32 %v692, %v693
    %v695 = vand.u32 %v694, 4294901760
    %696 = vmatpush1.msra.mxu0 %v695
    %697 = vmatprep.subr.mxu0 0.0
    %v698 = vand.u32 %v534, 4294901760
    %v699 = vsub.f32 %v534, %v698
    %v700 = vand.u32 %v699, 4294901760
    %v701 = vsub.f32 %v699, %v700
    %v702 = vand.u32 %v701, 4294901760
    %703 = vmatpush1.msra.mxu0 %v702
    %704 = vmatprep.subr.mxu0 0.0
    %v705 = vand.u32 %v533, 4294901760
    %v706 = vsub.f32 %v533, %v705
    %v707 = vand.u32 %v706, 4294901760
    %v708 = vsub.f32 %v706, %v707
    %v709 = vand.u32 %v708, 4294901760
    %710 = vmatpush1.msra.mxu0 %v709
    %711 = vmatprep.subr.mxu0 0.0
    %v712 = vand.u32 %v532, 4294901760
    %v713 = vsub.f32 %v532, %v712
    %v714 = vand.u32 %v713, 4294901760
    %v715 = vsub.f32 %v713, %v714
    %v716 = vand.u32 %v715, 4294901760
    %717 = vmatpush1.msra.mxu0 %v716
    %718 = vmatprep.subr.mxu0 0.0
    %v719 = vand.u32 %v531, 4294901760
    %v720 = vsub.f32 %v531, %v719
    %v721 = vand.u32 %v720, 4294901760
    %v722 = vsub.f32 %v720, %v721
    %v723 = vand.u32 %v722, 4294901760
    %724 = vmatpush1.msra.mxu0 %v723
    %725 = vmatprep.subr.mxu0 0.0
    %v726 = vand.u32 %v530, 4294901760
    %v727 = vsub.f32 %v530, %v726
    %v728 = vand.u32 %v727, 4294901760
    %v729 = vsub.f32 %v727, %v728
    %v730 = vand.u32 %v729, 4294901760
    %731 = vmatpush1.msra.mxu0 %v730
    %732 = vmatprep.subr.mxu0 0.0
    %v733 = vand.u32 %v529, 4294901760
    %v734 = vsub.f32 %v529, %v733
    %v735 = vand.u32 %v734, 4294901760
    %v736 = vsub.f32 %v734, %v735
    %v737 = vand.u32 %v736, 4294901760
    %738 = vmatpush1.msra.mxu0 %v737
    %739 = vmatprep.subr.mxu0 0.0
    %v740 = vand.u32 %v528, 4294901760
    %v741 = vsub.f32 %v528, %v740
    %v742 = vand.u32 %v741, 4294901760
    %v743 = vsub.f32 %v741, %v742
    %v744 = vand.u32 %v743, 4294901760
    %745 = vmatpush1.msra.mxu0 %v744
    %746 = vmatprep.subr.mxu0 0.0
    %v747 = vand.u32 %v527, 4294901760
    %v748 = vsub.f32 %v527, %v747
    %v749 = vand.u32 %v748, 4294901760
    %v750 = vsub.f32 %v748, %v749
    %v751 = vand.u32 %v750, 4294901760
    %752 = vmatpush1.msra.mxu0 %v751
    %753 = vmatprep.subr.mxu0 0.0
    %754 = vmatpush2.msra.mxu0 0.0
    %755 = vmatprep.subr.mxu0 0.0
    %756 = vmatpush2.msra.mxu0 0.0
    %757 = vmatprep.subr.mxu0 0.0
    %758 = vmatpush2.msra.mxu0 0.0
    %759 = vmatprep.subr.mxu0 0.0
    %760 = vmatpush2.msra.mxu0 0.0
    %761 = vmatprep.subr.mxu0 0.0
    %762 = vmatpush2.msra.mxu0 0.0
    %763 = vmatprep.subr.mxu0 0.0
    %764 = vmatpush2.msra.mxu0 0.0
    %765 = vmatprep.subr.mxu0 0.0
    %766 = vmatpush2.msra.mxu0 0.0
    %767 = vmatprep.subr.mxu0 0.0
    %768 = vmatpush2.msra.mxu0 0.0
    %769 = vmatprep.subr.mxu0 0.0
    %770 = vmatpush2.msra.mxu0 0.0
    %771 = vmatprep.subr.mxu0 0.0
    %772 = vmatpush2.msra.mxu0 0.0
    %773 = vmatprep.subr.mxu0 0.0
    %774 = vmatpush2.msra.mxu0 0.0
    %775 = vmatprep.subr.mxu0 0.0
    %776 = vmatpush2.msra.mxu0 0.0
    %777 = vmatprep.subr.mxu0 0.0
    %778 = vmatpush2.msra.mxu0 0.0
    %779 = vmatprep.subr.mxu0 0.0
    %780 = vmatpush2.msra.mxu0 0.0
    %781 = vmatprep.subr.mxu0 0.0
    %782 = vmatpush2.msra.mxu0 0.0
    %783 = vmatprep.subr.mxu0 0.0
    %784 = vmatpush2.msra.mxu0 0.0
    %785 = vmatprep.mubr.f32.mxu0 0.0
    %v786 = vand.u32 %v526, 4294901760
    %787 = vmatmul.mubr.f32.gmra.mxu0 %v786
    %v788 = vpop.f32.mrf.mxu0
    %v789 = vadd.f32 %v638, %v788
    %v790 = vpop.f32.mrf.mxu0
    %791 = vdwg.mxu0
    %792 = vmatprep.subr.mxu0 0.0
    %v793 = vand.u32 %v542, 4294901760
    %v794 = vsub.f32 %v542, %v793
    %795 = vmatpush1.msra.mxu0 %v794
    %796 = vmatprep.subr.mxu0 0.0
    %v797 = vand.u32 %v541, 4294901760
    %v798 = vsub.f32 %v541, %v797
    %799 = vmatpush1.msra.mxu0 %v798
    %800 = vmatprep.subr.mxu0 0.0
    %v801 = vand.u32 %v540, 4294901760
    %v802 = vsub.f32 %v540, %v801
    %803 = vmatpush1.msra.mxu0 %v802
    %804 = vmatprep.subr.mxu0 0.0
    %v805 = vand.u32 %v539, 4294901760
    %v806 = vsub.f32 %v539, %v805
    %807 = vmatpush1.msra.mxu0 %v806
    %808 = vmatprep.subr.mxu0 0.0
    %v809 = vand.u32 %v538, 4294901760
    %v810 = vsub.f32 %v538, %v809
    %811 = vmatpush1.msra.mxu0 %v810
    %812 = vmatprep.subr.mxu0 0.0
    %v813 = vand.u32 %v537, 4294901760
    %v814 = vsub.f32 %v537, %v813
    %815 = vmatpush1.msra.mxu0 %v814
    %816 = vmatprep.subr.mxu0 0.0
    %v817 = vand.u32 %v536, 4294901760
    %v818 = vsub.f32 %v536, %v817
    %819 = vmatpush1.msra.mxu0 %v818
    %820 = vmatprep.subr.mxu0 0.0
    %v821 = vand.u32 %v535, 4294901760
    %v822 = vsub.f32 %v535, %v821
    %823 = vmatpush1.msra.mxu0 %v822
    %824 = vmatprep.subr.mxu0 0.0
    %v825 = vand.u32 %v534, 4294901760
    %v826 = vsub.f32 %v534, %v825
    %827 = vmatpush1.msra.mxu0 %v826
    %828 = vmatprep.subr.mxu0 0.0
    %v829 = vand.u32 %v533, 4294901760
    %v830 = vsub.f32 %v533, %v829
    %831 = vmatpush1.msra.mxu0 %v830
    %832 = vmatprep.subr.mxu0 0.0
    %v833 = vand.u32 %v532, 4294901760
    %v834 = vsub.f32 %v532, %v833
    %835 = vmatpush1.msra.mxu0 %v834
    %836 = vmatprep.subr.mxu0 0.0
    %v837 = vand.u32 %v531, 4294901760
    %v838 = vsub.f32 %v531, %v837
    %839 = vmatpush1.msra.mxu0 %v838
    %840 = vmatprep.subr.mxu0 0.0
    %v841 = vand.u32 %v530, 4294901760
    %v842 = vsub.f32 %v530, %v841
    %843 = vmatpush1.msra.mxu0 %v842
    %844 = vmatprep.subr.mxu0 0.0
    %v845 = vand.u32 %v529, 4294901760
    %v846 = vsub.f32 %v529, %v845
    %847 = vmatpush1.msra.mxu0 %v846
    %848 = vmatprep.subr.mxu0 0.0
    %v849 = vand.u32 %v528, 4294901760
    %v850 = vsub.f32 %v528, %v849
    %851 = vmatpush1.msra.mxu0 %v850
    %852 = vmatprep.subr.mxu0 0.0
    %v853 = vand.u32 %v527, 4294901760
    %v854 = vsub.f32 %v527, %v853
    %855 = vmatpush1.msra.mxu0 %v854
    %856 = vmatprep.subr.mxu0 0.0
    %857 = vmatpush2.msra.mxu0 0.0
    %858 = vmatprep.subr.mxu0 0.0
    %859 = vmatpush2.msra.mxu0 0.0
    %860 = vmatprep.subr.mxu0 0.0
    %861 = vmatpush2.msra.mxu0 0.0
    %862 = vmatprep.subr.mxu0 0.0
    %863 = vmatpush2.msra.mxu0 0.0
    %864 = vmatprep.subr.mxu0 0.0
    %865 = vmatpush2.msra.mxu0 0.0
    %866 = vmatprep.subr.mxu0 0.0
    %867 = vmatpush2.msra.mxu0 0.0
    %868 = vmatprep.subr.mxu0 0.0
    %869 = vmatpush2.msra.mxu0 0.0
    %870 = vmatprep.subr.mxu0 0.0
    %871 = vmatpush2.msra.mxu0 0.0
    %872 = vmatprep.subr.mxu0 0.0
    %873 = vmatpush2.msra.mxu0 0.0
    %874 = vmatprep.subr.mxu0 0.0
    %875 = vmatpush2.msra.mxu0 0.0
    %876 = vmatprep.subr.mxu0 0.0
    %877 = vmatpush2.msra.mxu0 0.0
    %878 = vmatprep.subr.mxu0 0.0
    %879 = vmatpush2.msra.mxu0 0.0
    %880 = vmatprep.subr.mxu0 0.0
    %881 = vmatpush2.msra.mxu0 0.0
    %882 = vmatprep.subr.mxu0 0.0
    %883 = vmatpush2.msra.mxu0 0.0
    %884 = vmatprep.subr.mxu0 0.0
    %885 = vmatpush2.msra.mxu0 0.0
    %886 = vmatprep.subr.mxu0 0.0
    %887 = vmatpush2.msra.mxu0 0.0
    %888 = vmatprep.mubr.f32.mxu0 0.0
    %v889 = vand.u32 %v526, 4294901760
    %v890 = vsub.f32 %v526, %v889
    %891 = vmatmul.mubr.f32.gmra.mxu0 %v890
    %v892 = vpop.f32.mrf.mxu0
    %v893 = vadd.f32 %v789, %v892
    %v894 = vpop.f32.mrf.mxu0
    %895 = vdwg.mxu0
    %896 = vmatprep.subr.mxu0 0.0
    %v897 = vand.u32 %v542, 4294901760
    %898 = vmatpush1.msra.mxu0 %v897
    %899 = vmatprep.subr.mxu0 0.0
    %v900 = vand.u32 %v541, 4294901760
    %901 = vmatpush1.msra.mxu0 %v900
    %902 = vmatprep.subr.mxu0 0.0
    %v903 = vand.u32 %v540, 4294901760
    %904 = vmatpush1.msra.mxu0 %v903
    %905 = vmatprep.subr.mxu0 0.0
    %v906 = vand.u32 %v539, 4294901760
    %907 = vmatpush1.msra.mxu0 %v906
    %908 = vmatprep.subr.mxu0 0.0
    %v909 = vand.u32 %v538, 4294901760
    %910 = vmatpush1.msra.mxu0 %v909
    %911 = vmatprep.subr.mxu0 0.0
    %v912 = vand.u32 %v537, 4294901760
    %913 = vmatpush1.msra.mxu0 %v912
    %914 = vmatprep.subr.mxu0 0.0
    %v915 = vand.u32 %v536, 4294901760
    %916 = vmatpush1.msra.mxu0 %v915
    %917 = vmatprep.subr.mxu0 0.0
    %v918 = vand.u32 %v535, 4294901760
    %919 = vmatpush1.msra.mxu0 %v918
    %920 = vmatprep.subr.mxu0 0.0
    %v921 = vand.u32 %v534, 4294901760
    %922 = vmatpush1.msra.mxu0 %v921
    %923 = vmatprep.subr.mxu0 0.0
    %v924 = vand.u32 %v533, 4294901760
    %925 = vmatpush1.msra.mxu0 %v924
    %926 = vmatprep.subr.mxu0 0.0
    %v927 = vand.u32 %v532, 4294901760
    %928 = vmatpush1.msra.mxu0 %v927
    %929 = vmatprep.subr.mxu0 0.0
    %v930 = vand.u32 %v531, 4294901760
    %931 = vmatpush1.msra.mxu0 %v930
    %932 = vmatprep.subr.mxu0 0.0
    %v933 = vand.u32 %v530, 4294901760
    %934 = vmatpush1.msra.mxu0 %v933
    %935 = vmatprep.subr.mxu0 0.0
    %v936 = vand.u32 %v529, 4294901760
    %937 = vmatpush1.msra.mxu0 %v936
    %938 = vmatprep.subr.mxu0 0.0
    %v939 = vand.u32 %v528, 4294901760
    %940 = vmatpush1.msra.mxu0 %v939
    %941 = vmatprep.subr.mxu0 0.0
    %v942 = vand.u32 %v527, 4294901760
    %943 = vmatpush1.msra.mxu0 %v942
    %944 = vmatprep.subr.mxu0 0.0
    %945 = vmatpush2.msra.mxu0 0.0
    %946 = vmatprep.subr.mxu0 0.0
    %947 = vmatpush2.msra.mxu0 0.0
    %948 = vmatprep.subr.mxu0 0.0
    %949 = vmatpush2.msra.mxu0 0.0
    %950 = vmatprep.subr.mxu0 0.0
    %951 = vmatpush2.msra.mxu0 0.0
    %952 = vmatprep.subr.mxu0 0.0
    %953 = vmatpush2.msra.mxu0 0.0
    %954 = vmatprep.subr.mxu0 0.0
    %955 = vmatpush2.msra.mxu0 0.0
    %956 = vmatprep.subr.mxu0 0.0
    %957 = vmatpush2.msra.mxu0 0.0
    %958 = vmatprep.subr.mxu0 0.0
    %959 = vmatpush2.msra.mxu0 0.0
    %960 = vmatprep.subr.mxu0 0.0
    %961 = vmatpush2.msra.mxu0 0.0
    %962 = vmatprep.subr.mxu0 0.0
    %963 = vmatpush2.msra.mxu0 0.0
    %964 = vmatprep.subr.mxu0 0.0
    %965 = vmatpush2.msra.mxu0 0.0
    %966 = vmatprep.subr.mxu0 0.0
    %967 = vmatpush2.msra.mxu0 0.0
    %968 = vmatprep.subr.mxu0 0.0
    %969 = vmatpush2.msra.mxu0 0.0
    %970 = vmatprep.subr.mxu0 0.0
    %971 = vmatpush2.msra.mxu0 0.0
    %972 = vmatprep.subr.mxu0 0.0
    %973 = vmatpush2.msra.mxu0 0.0
    %974 = vmatprep.subr.mxu0 0.0
    %975 = vmatpush2.msra.mxu0 0.0
    %976 = vmatprep.mubr.f32.mxu0 0.0
    %v977 = vand.u32 %v526, 4294901760
    %v978 = vsub.f32 %v526, %v977
    %v979 = vand.u32 %v978, 4294901760
    %980 = vmatmul.mubr.f32.gmra.mxu0 %v979
    %v981 = vpop.f32.mrf.mxu0
    %v982 = vadd.f32 %v893, %v981
    %v983 = vpop.f32.mrf.mxu0
    %984 = vdwg.mxu0
    %985 = vmatprep.subr.mxu0 0.0
    %v986 = vand.u32 %v542, 4294901760
    %v987 = vsub.f32 %v542, %v986
    %v988 = vand.u32 %v987, 4294901760
    %989 = vmatpush1.msra.mxu0 %v988
    %990 = vmatprep.subr.mxu0 0.0
    %v991 = vand.u32 %v541, 4294901760
    %v992 = vsub.f32 %v541, %v991
    %v993 = vand.u32 %v992, 4294901760
    %994 = vmatpush1.msra.mxu0 %v993
    %995 = vmatprep.subr.mxu0 0.0
    %v996 = vand.u32 %v540, 4294901760
    %v997 = vsub.f32 %v540, %v996
    %v998 = vand.u32 %v997, 4294901760
    %999 = vmatpush1.msra.mxu0 %v998
    %1000 = vmatprep.subr.mxu0 0.0
    %v1001 = vand.u32 %v539, 4294901760
    %v1002 = vsub.f32 %v539, %v1001
    %v1003 = vand.u32 %v1002, 4294901760
    %1004 = vmatpush1.msra.mxu0 %v1003
    %1005 = vmatprep.subr.mxu0 0.0
    %v1006 = vand.u32 %v538, 4294901760
    %v1007 = vsub.f32 %v538, %v1006
    %v1008 = vand.u32 %v1007, 4294901760
    %1009 = vmatpush1.msra.mxu0 %v1008
    %1010 = vmatprep.subr.mxu0 0.0
    %v1011 = vand.u32 %v537, 4294901760
    %v1012 = vsub.f32 %v537, %v1011
    %v1013 = vand.u32 %v1012, 4294901760
    %1014 = vmatpush1.msra.mxu0 %v1013
    %1015 = vmatprep.subr.mxu0 0.0
    %v1016 = vand.u32 %v536, 4294901760
    %v1017 = vsub.f32 %v536, %v1016
    %v1018 = vand.u32 %v1017, 4294901760
    %1019 = vmatpush1.msra.mxu0 %v1018
    %1020 = vmatprep.subr.mxu0 0.0
    %v1021 = vand.u32 %v535, 4294901760
    %v1022 = vsub.f32 %v535, %v1021
    %v1023 = vand.u32 %v1022, 4294901760
    %1024 = vmatpush1.msra.mxu0 %v1023
    %1025 = vmatprep.subr.mxu0 0.0
    %v1026 = vand.u32 %v534, 4294901760
    %v1027 = vsub.f32 %v534, %v1026
    %v1028 = vand.u32 %v1027, 4294901760
    %1029 = vmatpush1.msra.mxu0 %v1028
    %1030 = vmatprep.subr.mxu0 0.0
    %v1031 = vand.u32 %v533, 4294901760
    %v1032 = vsub.f32 %v533, %v1031
    %v1033 = vand.u32 %v1032, 4294901760
    %1034 = vmatpush1.msra.mxu0 %v1033
    %1035 = vmatprep.subr.mxu0 0.0
    %v1036 = vand.u32 %v532, 4294901760
    %v1037 = vsub.f32 %v532, %v1036
    %v1038 = vand.u32 %v1037, 4294901760
    %1039 = vmatpush1.msra.mxu0 %v1038
    %1040 = vmatprep.subr.mxu0 0.0
    %v1041 = vand.u32 %v531, 4294901760
    %v1042 = vsub.f32 %v531, %v1041
    %v1043 = vand.u32 %v1042, 4294901760
    %1044 = vmatpush1.msra.mxu0 %v1043
    %1045 = vmatprep.subr.mxu0 0.0
    %v1046 = vand.u32 %v530, 4294901760
    %v1047 = vsub.f32 %v530, %v1046
    %v1048 = vand.u32 %v1047, 4294901760
    %1049 = vmatpush1.msra.mxu0 %v1048
    %1050 = vmatprep.subr.mxu0 0.0
    %v1051 = vand.u32 %v529, 4294901760
    %v1052 = vsub.f32 %v529, %v1051
    %v1053 = vand.u32 %v1052, 4294901760
    %1054 = vmatpush1.msra.mxu0 %v1053
    %1055 = vmatprep.subr.mxu0 0.0
    %v1056 = vand.u32 %v528, 4294901760
    %v1057 = vsub.f32 %v528, %v1056
    %v1058 = vand.u32 %v1057, 4294901760
    %1059 = vmatpush1.msra.mxu0 %v1058
    %1060 = vmatprep.subr.mxu0 0.0
    %v1061 = vand.u32 %v527, 4294901760
    %v1062 = vsub.f32 %v527, %v1061
    %v1063 = vand.u32 %v1062, 4294901760
    %1064 = vmatpush1.msra.mxu0 %v1063
    %1065 = vmatprep.subr.mxu0 0.0
    %1066 = vmatpush2.msra.mxu0 0.0
    %1067 = vmatprep.subr.mxu0 0.0
    %1068 = vmatpush2.msra.mxu0 0.0
    %1069 = vmatprep.subr.mxu0 0.0
    %1070 = vmatpush2.msra.mxu0 0.0
    %1071 = vmatprep.subr.mxu0 0.0
    %1072 = vmatpush2.msra.mxu0 0.0
    %1073 = vmatprep.subr.mxu0 0.0
    %1074 = vmatpush2.msra.mxu0 0.0
    %1075 = vmatprep.subr.mxu0 0.0
    %1076 = vmatpush2.msra.mxu0 0.0
    %1077 = vmatprep.subr.mxu0 0.0
    %1078 = vmatpush2.msra.mxu0 0.0
    %1079 = vmatprep.subr.mxu0 0.0
    %1080 = vmatpush2.msra.mxu0 0.0
    %1081 = vmatprep.subr.mxu0 0.0
    %1082 = vmatpush2.msra.mxu0 0.0
    %1083 = vmatprep.subr.mxu0 0.0
    %1084 = vmatpush2.msra.mxu0 0.0
    %1085 = vmatprep.subr.mxu0 0.0
    %1086 = vmatpush2.msra.mxu0 0.0
    %1087 = vmatprep.subr.mxu0 0.0
    %1088 = vmatpush2.msra.mxu0 0.0
    %1089 = vmatprep.subr.mxu0 0.0
    %1090 = vmatpush2.msra.mxu0 0.0
    %1091 = vmatprep.subr.mxu0 0.0
    %1092 = vmatpush2.msra.mxu0 0.0
    %1093 = vmatprep.subr.mxu0 0.0
    %1094 = vmatpush2.msra.mxu0 0.0
    %1095 = vmatprep.subr.mxu0 0.0
    %1096 = vmatpush2.msra.mxu0 0.0
    %1097 = vmatprep.mubr.f32.mxu0 0.0
    %v1098 = vand.u32 %v526, 4294901760
    %1099 = vmatmul.mubr.f32.gmra.mxu0 %v1098
    %v1100 = vpop.f32.mrf.mxu0
    %v1101 = vadd.f32 %v982, %v1100
    %v1102 = vpop.f32.mrf.mxu0
    %1103 = vdwg.mxu0
    %1104 = vmatprep.subr.mxu0 0.0
    %v1105 = vand.u32 %v542, 4294901760
    %1106 = vmatpush1.msra.mxu0 %v1105
    %1107 = vmatprep.subr.mxu0 0.0
    %v1108 = vand.u32 %v541, 4294901760
    %1109 = vmatpush1.msra.mxu0 %v1108
    %1110 = vmatprep.subr.mxu0 0.0
    %v1111 = vand.u32 %v540, 4294901760
    %1112 = vmatpush1.msra.mxu0 %v1111
    %1113 = vmatprep.subr.mxu0 0.0
    %v1114 = vand.u32 %v539, 4294901760
    %1115 = vmatpush1.msra.mxu0 %v1114
    %1116 = vmatprep.subr.mxu0 0.0
    %v1117 = vand.u32 %v538, 4294901760
    %1118 = vmatpush1.msra.mxu0 %v1117
    %1119 = vmatprep.subr.mxu0 0.0
    %v1120 = vand.u32 %v537, 4294901760
    %1121 = vmatpush1.msra.mxu0 %v1120
    %1122 = vmatprep.subr.mxu0 0.0
    %v1123 = vand.u32 %v536, 4294901760
    %1124 = vmatpush1.msra.mxu0 %v1123
    %1125 = vmatprep.subr.mxu0 0.0
    %v1126 = vand.u32 %v535, 4294901760
    %1127 = vmatpush1.msra.mxu0 %v1126
    %1128 = vmatprep.subr.mxu0 0.0
    %v1129 = vand.u32 %v534, 4294901760
    %1130 = vmatpush1.msra.mxu0 %v1129
    %1131 = vmatprep.subr.mxu0 0.0
    %v1132 = vand.u32 %v533, 4294901760
    %1133 = vmatpush1.msra.mxu0 %v1132
    %1134 = vmatprep.subr.mxu0 0.0
    %v1135 = vand.u32 %v532, 4294901760
    %1136 = vmatpush1.msra.mxu0 %v1135
    %1137 = vmatprep.subr.mxu0 0.0
    %v1138 = vand.u32 %v531, 4294901760
    %1139 = vmatpush1.msra.mxu0 %v1138
    %1140 = vmatprep.subr.mxu0 0.0
    %v1141 = vand.u32 %v530, 4294901760
    %1142 = vmatpush1.msra.mxu0 %v1141
    %1143 = vmatprep.subr.mxu0 0.0
    %v1144 = vand.u32 %v529, 4294901760
    %1145 = vmatpush1.msra.mxu0 %v1144
    %1146 = vmatprep.subr.mxu0 0.0
    %v1147 = vand.u32 %v528, 4294901760
    %1148 = vmatpush1.msra.mxu0 %v1147
    %1149 = vmatprep.subr.mxu0 0.0
    %v1150 = vand.u32 %v527, 4294901760
    %1151 = vmatpush1.msra.mxu0 %v1150
    %1152 = vmatprep.subr.mxu0 0.0
    %1153 = vmatpush2.msra.mxu0 0.0
    %1154 = vmatprep.subr.mxu0 0.0
    %1155 = vmatpush2.msra.mxu0 0.0
    %1156 = vmatprep.subr.mxu0 0.0
    %1157 = vmatpush2.msra.mxu0 0.0
    %1158 = vmatprep.subr.mxu0 0.0
    %1159 = vmatpush2.msra.mxu0 0.0
    %1160 = vmatprep.subr.mxu0 0.0
    %1161 = vmatpush2.msra.mxu0 0.0
    %1162 = vmatprep.subr.mxu0 0.0
    %1163 = vmatpush2.msra.mxu0 0.0
    %1164 = vmatprep.subr.mxu0 0.0
    %1165 = vmatpush2.msra.mxu0 0.0
    %1166 = vmatprep.subr.mxu0 0.0
    %1167 = vmatpush2.msra.mxu0 0.0
    %1168 = vmatprep.subr.mxu0 0.0
    %1169 = vmatpush2.msra.mxu0 0.0
    %1170 = vmatprep.subr.mxu0 0.0
    %1171 = vmatpush2.msra.mxu0 0.0
    %1172 = vmatprep.subr.mxu0 0.0
    %1173 = vmatpush2.msra.mxu0 0.0
    %1174 = vmatprep.subr.mxu0 0.0
    %1175 = vmatpush2.msra.mxu0 0.0
    %1176 = vmatprep.subr.mxu0 0.0
    %1177 = vmatpush2.msra.mxu0 0.0
    %1178 = vmatprep.subr.mxu0 0.0
    %1179 = vmatpush2.msra.mxu0 0.0
    %1180 = vmatprep.subr.mxu0 0.0
    %1181 = vmatpush2.msra.mxu0 0.0
    %1182 = vmatprep.subr.mxu0 0.0
    %1183 = vmatpush2.msra.mxu0 0.0
    %1184 = vmatprep.mubr.f32.mxu0 0.0
    %v1185 = vand.u32 %v526, 4294901760
    %1186 = vmatmul.mubr.f32.gmra.mxu0 %v1185
    %v1187 = vpop.f32.mrf.mxu0
    %v1188 = vadd.f32 %v1101, %v1187
    %v1189 = vpop.f32.mrf.mxu0
    %1190 = vdwg.mxu0
    %vm1191 = vcmask 39936
    %1192 = vst.msk [vmem:[#allocation2] sm:$0xff] %vm1191, %v1188
    // Predicated region
    $region22: #{tpu_custom_call.1} parent=1 // pred_check
      _
    $region23: #{tpu_custom_call.1} parent=1 // pred_check_branch
      %1194 = sbr.rel (0) target = $region25
    $region24: #{tpu_custom_call.1} parent=1 // pred_region
      %s1196 = ssub.s32 128, 128
      %1197 = vsyncadd [#allocation3], %s1196
      %s1199 = sshll.u32 [#allocation2], 4
      %s1200 = int_to_ptr.vmem [resolvable:$true] %s1199
      %1202 = dma.vmem_to_hbm [thread:$0]  %s1200, 128, %s5, [#allocation3]
    $region25: #{tpu_custom_call.1} parent=1 // pred_fallthru
      _
    // Predicated region
    $region26: #{tpu_custom_call.1} parent=1 // pred_check
      _
    $region27: #{tpu_custom_call.1} parent=1 // pred_check_branch
      %1204 = sbr.rel (0) target = $region29
    $region28: #{tpu_custom_call.1} parent=1 // pred_region
      %1205 = dma.done [#allocation3], 128
    $region29: #{tpu_custom_call.1} parent=1 // pred_fallthru
      _
    %1206 = vsyncpa [#allocation3], 1

</llo_original>
